<compile_context>
chip_gen: v7x
topology: tpu7x:2x2x1
jax: 0.10.0
libtpu: 0.0.40
codegen_flags: <defaults>
</compile_context>

<pallas_src>
from functools import partial

import numpy as np
import jax
import jax.numpy as jnp
from jax import lax
from jax.experimental import pallas as pl
from jax.experimental.pallas import tpu as pltpu


def _round_up(x, m):
    return (x + m - 1) // m * m


# ----------------------------------------------------------------------------
# Host-side weight construction (PIL / Pillow BILINEAR, antialiased triangle).
# ----------------------------------------------------------------------------
def _pil_bilinear_weights(dst_size, src_size):
    """Dense (dst, src) row-stochastic matrix emulating PIL.Image BILINEAR resize."""
    scale = src_size / dst_size
    filterscale = max(scale, 1.0)
    support = 1.0 * filterscale  # bilinear (triangle) filter support
    w = np.zeros((dst_size, src_size), dtype=np.float64)
    for i in range(dst_size):
        center = (i + 0.5) * scale
        xmin = max(int(center - support + 0.5), 0)
        xmax = min(int(center + support + 0.5), src_size)
        xs = np.arange(xmin, xmax, dtype=np.float64)
        ws = np.clip(1.0 - np.abs((xs + 0.5 - center) / filterscale), 0.0, None)
        s = ws.sum()
        if s <= 0.0:  # degenerate row: fall back to nearest neighbour
            w[i, min(max(int(center), 0), src_size - 1)] = 1.0
        else:
            w[i, xmin:xmax] = ws / s
    return w


def _padded_resize_weights(orig, pad_before, pad_after):
    """Resize-from-padded weights restricted to the real (un-padded) pixels.

    Returns (W_center, covered): W_center is (orig, orig); covered[i] is the weight
    mass row i places on real pixels (<= 1; the remainder hits the constant fill).
    """
    src = orig + pad_before + pad_after
    w_full = _pil_bilinear_weights(orig, src)              # rows sum to 1
    w_center = w_full[:, pad_before:pad_before + orig]     # (orig, orig)
    covered = w_center.sum(axis=1)
    return w_center.astype(np.float32), covered.astype(np.float32)


# ----------------------------------------------------------------------------
# Pallas kernel: fused (pad -> bilinear resize -> uint8-style rounding) per block.
#   img_ref : (T, H, W)       T image planes (flattened N*C) of this grid step
#   wy_ref  : (H, H)          vertical interpolation matrix (f32 or bf16)
#   wxt_ref : (W, tile_W)     horizontal interpolation matrix, pre-transposed
#   bias_ref: (H, tile_W)     fill contribution of the padded border (+0.5 folded in)
#   o_ref   : (T, H, tile_W)  output block
#   xr_ref  : (T*H, tile_W)   f32 VMEM scratch holding the horizontal pass result
# ----------------------------------------------------------------------------
def _pad_resize_kernel(img_ref, wy_ref, wxt_ref, bias_ref, o_ref, xr_ref):
    t, h, w = img_ref.shape
    cdt = wy_ref.dtype          # matmul compute dtype (float32 or bfloat16)

    # Stage 1: horizontal resize, fused across every plane in the block.
    #   One (t*h, w) @ (w, tile_w) MXU matmul instead of t tiny (h, w) ones.
    x2d = img_ref[...].reshape(t * h, w).astype(cdt)
    xr_ref[...] = jnp.dot(x2d, wxt_ref[...], preferred_element_type=jnp.float32)

    wy = wy_ref[...]            # hoisted out of the loop
    bias = bias_ref[...]        # fill contribution (+0.5 round-half-up folded in)

    # Stage 2: vertical resize per plane (M = H is fixed by the algorithm).
    def body(b, carry):
        start = pl.multiple_of(b * h, h)
        xr_b = xr_ref[pl.ds(start, h), :].astype(cdt)
        y = jnp.dot(wy, xr_b, preferred_element_type=jnp.float32)
        o_ref[b] = jnp.clip(jnp.floor(y + bias), 0.0, 255.0).astype(o_ref.dtype)
        return carry

    lax.fori_loop(0, t, body, 0, unroll=min(t, 8))


# ----------------------------------------------------------------------------
# Generation-aware VMEM budgeting and tile selection.
# ----------------------------------------------------------------------------
def _tpu_limits():
    """(vmem_capacity_bytes, tensorcores_per_chip) with safe fallbacks."""
    vmem_cap = 64 * 1024 * 1024            # conservative default (v7x-sized)
    try:
        vmem_cap = int(pltpu.get_tpu_info().vmem_capacity_bytes)
    except Exception:
        pass
    num_cores = 1
    try:
        kind = jax.devices()[0].device_kind.lower()
        if any(tag in kind for tag in ("v4", "v5p", "v7", "7x")):
            num_cores = 2                  # megacore: 'parallel' grid axis is sharded
    except Exception:
        pass
    return vmem_cap, num_cores


def _pick_tiles(nc, h, w, weight_itemsize, vmem_budget, num_cores):
    """Choose (tile_nc, tile_w) so the *real* pipelined VMEM footprint fits the budget.

    Footprint counts: 2x double-buffered input block + 2x double-buffered output
    block + f32 xr scratch + in-kernel cast copy of the image + weight/bias blocks,
    all with (8, 128) sublane/lane padding of the trailing dims.
    """
    hpad = _round_up(h, 8)
    wpad = _round_up(w, 128)

    def footprint(tile_nc, tile_w):
        twpad = _round_up(tile_w, 128)
        img_blk = tile_nc * hpad * wpad * 4              # f32 input block
        out_blk = tile_nc * hpad * twpad * 4             # f32 output block
        xr_scr = tile_nc * hpad * twpad * 4              # f32 scratch
        cast_tmp = tile_nc * hpad * wpad * weight_itemsize
        wy_blk = hpad * _round_up(h, 128) * weight_itemsize
        wxt_blk = _round_up(w, 8) * twpad * weight_itemsize
        bias_blk = hpad * twpad * 4
        nb_wx = 1 if tile_w == w else 2                  # weights single-buffered if invariant
        return (2 * img_blk + 2 * out_blk + xr_scr + cast_tmp
                + wy_blk + nb_wx * (wxt_blk + bias_blk))

    # Tile the output width only when even a single plane does not fit (large images
    # on v7x's 64 MiB VMEM).  The image block stays resident across W-tiles.
    tile_w = w
    if footprint(1, w) > vmem_budget:
        cands = [t for t in range(128, w, 128) if w % t == 0]
        fitting = [t for t in cands if footprint(1, t) <= vmem_budget]
        if fitting:
            tile_w = max(fitting)
        elif cands:
            tile_w = min(cands)            # best effort

    divisors = [t for t in range(1, nc + 1) if nc % t == 0]
    fitting = [t for t in divisors if footprint(t, tile_w) <= vmem_budget]
    if not fitting:
        return 1, tile_w

    if num_cores >= 2:
        # Megacore: prefer an even number of parallel grid steps, ideally >= 4,
        # so both TensorCores stay busy and the pipeline has slack.
        best = [t for t in fitting if (nc // t) >= 4 and (nc // t) % 2 == 0]
        if not best:
            best = [t for t in fitting if (nc // t) >= 2 and (nc // t) % 2 == 0]
        if best:
            return max(best), tile_w
    # Single TensorCore: grid steps are pure overhead; take the largest tile that fits.
    return max(fitting), tile_w


# ----------------------------------------------------------------------------
# pallas_call wrapper.
# ----------------------------------------------------------------------------
@partial(jax.jit, static_argnames=("tile_nc", "tile_w", "vmem_limit"))
def _pad_resize_call(img_flat, wy, wxt, bias, *, tile_nc, tile_w, vmem_limit):
    nc, h, w = img_flat.shape
    num_w_tiles = pl.cdiv(w, tile_w)
    grid = (pl.cdiv(nc, tile_nc), num_w_tiles)

    # Grid-invariant blocks are single-buffered (no wasted VMEM on a second copy).
    invariant = pl.Buffered(1)
    wx_mode = pl.Buffered(1) if num_w_tiles == 1 else pl.Buffered(2)

    return pl.pallas_call(
        _pad_resize_kernel,
        out_shape=jax.ShapeDtypeStruct((nc, h, w), jnp.float32),
        grid_spec=pltpu.PrefetchScalarGridSpec(
            num_scalar_prefetch=0,
            grid=grid,
            in_specs=[
                # image block: constant across j (inner axis) -> not re-DMA'd per W-tile
                pl.BlockSpec((tile_nc, h, w), lambda i, j: (i, 0, 0)),
                pl.BlockSpec((h, h), lambda i, j: (0, 0), pipeline_mode=invariant),
                pl.BlockSpec((w, tile_w), lambda i, j: (0, j), pipeline_mode=wx_mode),
                pl.BlockSpec((h, tile_w), lambda i, j: (0, j), pipeline_mode=wx_mode),
            ],
            out_specs=pl.BlockSpec((tile_nc, h, tile_w), lambda i, j: (i, 0, j)),
            scratch_shapes=[pltpu.VMEM((tile_nc * h, tile_w), jnp.float32)],
        ),
        compiler_params=pltpu.CompilerParams(
            dimension_semantics=("parallel", "arbitrary"),
            vmem_limit_bytes=vmem_limit),
    )(img_flat, wy, wxt, bias)


# ----------------------------------------------------------------------------
# Module-equivalent wrapper (host-side randomness, deterministic seed).
# ----------------------------------------------------------------------------
class RandomPaddingAndResize:
    """Randomly pads an NCHW float image (values in [0,255]) with a constant fill
    and bilinearly resizes it back to the original resolution.

    weights_dtype=bfloat16 (default) runs the MXU matmuls in bf16 (2-3x matmul
    throughput on v6e/v7x); this can shift individual output pixels by +-1 gray
    level versus the exact path.  Pass weights_dtype=float32 for exact results.
    """

    def __init__(self, pad_percentage_range=(0.1, 0.1),
                 padding_value_range=(0, 255), seed=0,
                 weights_dtype=jnp.bfloat16):
        self.pad_percentage_range = pad_percentage_range
        self.padding_value_range = padding_value_range
        self.weights_dtype = jnp.dtype(weights_dtype)
        # TODO(synk): python `random.uniform/randint` global state of the original
        # module has no array-level equivalent; reproduced deterministically with a
        # seeded numpy RandomState instead.
        self._rng = np.random.RandomState(seed)
        self.last_params = None  # (px_l, px_r, py_t, py_b, fill) of the last call

        vmem_cap, self._num_cores = _tpu_limits()
        self._vmem_budget = int(vmem_cap * 0.70)   # tile-picking budget (gen-aware)
        self._vmem_limit = int(vmem_cap * 0.85)    # explicit scoped-VMEM limit

    def __call__(self, img):
        img = jnp.asarray(img, jnp.float32)
        n, c, h, w = img.shape

        # Same draw order as the PyTorch module: x_l, x_r, y_l, y_r, fill.
        pad_x_l = self._rng.uniform(0.0, self.pad_percentage_range[0] / 2)
        pad_x_r = self._rng.uniform(0.0, self.pad_percentage_range[0] / 2)
        pad_y_l = self._rng.uniform(0.0, self.pad_percentage_range[1] / 2)
        pad_y_r = self._rng.uniform(0.0, self.pad_percentage_range[1] / 2)
        fill = int(self._rng.randint(int(self.padding_value_range[0]),
                                     int(self.padding_value_range[1]) + 1))
        px_l, px_r = int(pad_x_l * w), int(pad_x_r * w)
        py_t, py_b = int(pad_y_l * h), int(pad_y_b_helper(pad_y_r, h))
        self.last_params = (px_l, px_r, py_t, py_b, fill)

        # Fold the constant pad into the separable resize matrices + a bias; the
        # +0.5 round-half-up constant is folded into the bias as well.
        wy, sy = _padded_resize_weights(h, py_t, py_b)       # (H, H), (H,)
        wx, sx = _padded_resize_weights(w, px_l, px_r)       # (W, W), (W,)
        bias = (float(fill) * (1.0 - np.outer(sy, sx)) + 0.5).astype(np.float32)

        img_flat = img.reshape(n * c, h, w)
        tile_nc, tile_w = _pick_tiles(n * c, h, w, self.weights_dtype.itemsize,
                                      self._vmem_budget, self._num_cores)
        out = _pad_resize_call(
            img_flat,
            jnp.asarray(wy, self.weights_dtype),
            jnp.asarray(np.ascontiguousarray(wx.T), self.weights_dtype),
            jnp.asarray(bias),
            tile_nc=tile_nc, tile_w=tile_w, vmem_limit=self._vmem_limit)
        # TODO(synk): emitting uint8 output would cut HBM write traffic 4x (values
        # are exact integers in [0,255]); kept f32 to preserve the float interface.
        return out.reshape(n, c, h, w)

    def __repr__(self):
        return (f'{self.__class__.__name__}(pad_percentage_range='
                f'{self.pad_percentage_range}, padding_value_range='
                f'{self.padding_value_range})')


def pad_y_b_helper(frac, h):
    # kept as a tiny helper purely so the draw order/int conversion mirrors the spec
    return frac * h


if __name__ == "__main__":
    key = jax.random.PRNGKey(0)
    # Small NCHW RGB image batch, integer values in [0, 255].
    img = jnp.round(jax.random.uniform(key, (2, 3, 16, 16),
                                       minval=0.0, maxval=255.0)).astype(jnp.float32)

    # Larger pad range so the small 16x16 demo images actually get nonzero padding.
    # Exact (f32-weight) path first: bit-level check against the numpy reference.
    transform = RandomPaddingAndResize(pad_percentage_range=(0.5, 0.5),
                                       padding_value_range=(0, 255), seed=0,
                                       weights_dtype=jnp.float32)
    out = jax.block_until_ready(transform(img))

    assert out.shape == img.shape and out.dtype == jnp.float32
    assert bool(jnp.all(out >= 0.0)) and bool(jnp.all(out <= 255.0))

    # Pure-numpy reference: materialise the pad, then apply the full (padded)
    # interpolation matrices.  Must match the folded kernel result.
    px_l, px_r, py_t, py_b, fill = transform.last_params
    np_img = np.asarray(img)
    padded = np.pad(np_img, ((0, 0), (0, 0), (py_t, py_b), (px_l, px_r)),
                    mode="constant", constant_values=fill)
    wy_full = _pil_bilinear_weights(16, 16 + py_t + py_b)
    wx_full = _pil_bilinear_weights(16, 16 + px_l + px_r)
    ref = np.einsum('yh,nchw,xw->ncyx', wy_full, padded, wx_full)
    ref = np.clip(np.floor(ref + 0.5), 0.0, 255.0)
    np.testing.assert_allclose(np.asarray(out), ref, atol=1.0)

    # Default bf16 fast path (same seed -> identical random pads/fill).  bf16
    # weights can flip the round-half-up by +-1 gray level (worst case 2).
    transform_bf16 = RandomPaddingAndResize(pad_percentage_range=(0.5, 0.5),
                                            padding_value_range=(0, 255), seed=0,
                                            weights_dtype=jnp.bfloat16)
    out_bf16 = jax.block_until_ready(transform_bf16(img))
    assert out_bf16.shape == img.shape
    np.testing.assert_allclose(np.asarray(out_bf16), ref, atol=2.0)

    print("KERNEL_OK")
</pallas_src>

<mosaic_0001>
module attributes {stable_mosaic.version = 11 : i64} {
  func.func @_pad_resize_kernel(%arg0: i32, %arg1: i32, %arg2: memref<6x16x16xf32, #tpu.memory_space<vmem>>, %arg3: memref<16x16xf32, #tpu.memory_space<vmem>>, %arg4: memref<16x16xf32, #tpu.memory_space<vmem>>, %arg5: memref<16x16xf32, #tpu.memory_space<vmem>>, %arg6: memref<6x16x16xf32, #tpu.memory_space<vmem>>, %arg7: memref<96x16xf32, #tpu.memory_space<vmem>>) attributes {dimension_semantics = [#tpu.dimension_semantics<parallel>, #tpu.dimension_semantics<arbitrary>], iteration_bounds = array<i64: 1, 1>, scalar_prefetch = 0 : i64, scratch_operands = 1 : i64, tpu.core_type = #tpu.core_type<tc>, window_params = [{transform_indices = @transform_0, window_bounds = array<i64: 6, 16, 16>}, {pipeline_mode = #tpu.pipeline_mode<synchronous>, transform_indices = @transform_1, window_bounds = array<i64: 16, 16>}, {pipeline_mode = #tpu.pipeline_mode<synchronous>, transform_indices = @transform_2, window_bounds = array<i64: 16, 16>}, {pipeline_mode = #tpu.pipeline_mode<synchronous>, transform_indices = @transform_3, window_bounds = array<i64: 16, 16>}, {transform_indices = @transform_4, window_bounds = array<i64: 6, 16, 16>}]} {
    %c0 = arith.constant 0 : index
    %c0_0 = arith.constant 0 : index
    %c0_1 = arith.constant 0 : index
    %0 = vector.load %arg2[%c0, %c0_0, %c0_1] : memref<6x16x16xf32, #tpu.memory_space<vmem>>, vector<6x16x16xf32>
    %1 = vector.shape_cast %0 : vector<6x16x16xf32> to vector<96x16xf32>
    %c0_2 = arith.constant 0 : index
    %c0_3 = arith.constant 0 : index
    %2 = vector.load %arg4[%c0_2, %c0_3] : memref<16x16xf32, #tpu.memory_space<vmem>>, vector<16x16xf32>
    %cst = arith.constant dense<0.000000e+00> : vector<96x16xf32>
    %3 = tpu.matmul %1, %2, %cst {dimension_numbers = #tpu.dot_dimension_numbers<[1], [0], [0], [1], [0, 0, 1, 1], [], []>} : vector<96x16xf32>, vector<16x16xf32>, vector<96x16xf32> -> vector<96x16xf32>
    %c0_4 = arith.constant 0 : index
    %c0_5 = arith.constant 0 : index
    %4 = vector.load %arg7[%c0_4, %c0_5] : memref<96x16xf32, #tpu.memory_space<vmem>>, vector<96x16xf32>
    tpu.vector_store %arg7[%c0_4, %c0_5], %3 {strides = array<i32>} : memref<96x16xf32, #tpu.memory_space<vmem>>, vector<96x16xf32>,
    %c0_6 = arith.constant 0 : index
    %c0_7 = arith.constant 0 : index
    %5 = vector.load %arg3[%c0_6, %c0_7] : memref<16x16xf32, #tpu.memory_space<vmem>>, vector<16x16xf32>
    %c0_8 = arith.constant 0 : index
    %c0_9 = arith.constant 0 : index
    %6 = vector.load %arg5[%c0_8, %c0_9] : memref<16x16xf32, #tpu.memory_space<vmem>>, vector<16x16xf32>
    %c0_i32 = arith.constant 0 : i32
    %c16_i32 = arith.constant 16 : i32
    %7 = arith.muli %c0_i32, %c16_i32 : i32
    %8 = tpu.assume_multiple %7, 16 : i32
    %9 = arith.index_cast %8 : i32 to index
    %c0_10 = arith.constant 0 : index
    %10 = vector.load %arg7[%9, %c0_10] : memref<96x16xf32, #tpu.memory_space<vmem>>, vector<16x16xf32>
    %cst_11 = arith.constant dense<0.000000e+00> : vector<16x16xf32>
    %11 = tpu.matmul %5, %10, %cst_11 {dimension_numbers = #tpu.dot_dimension_numbers<[1], [0], [0], [1], [0, 0, 1, 1], [], []>} : vector<16x16xf32>, vector<16x16xf32>, vector<16x16xf32> -> vector<16x16xf32>
    %12 = arith.addf %11, %6 : vector<16x16xf32>
    %13 = math.floor %12 : vector<16x16xf32>
    %cst_12 = arith.constant 0.000000e+00 : f32
    %cst_13 = arith.constant 2.550000e+02 : f32
    %14 = vector.broadcast %cst_12 : f32 to vector<16x16xf32>
    %15 = arith.maximumf %14, %13 : vector<16x16xf32>
    %16 = vector.broadcast %cst_13 : f32 to vector<16x16xf32>
    %17 = arith.minimumf %16, %15 : vector<16x16xf32>
    %18 = arith.index_cast %c0_i32 : i32 to index
    %c0_14 = arith.constant 0 : index
    %c0_15 = arith.constant 0 : index
    %19 = vector.load %arg6[%18, %c0_14, %c0_15] : memref<6x16x16xf32, #tpu.memory_space<vmem>>, vector<1x16x16xf32>
    %20 = vector.shape_cast %19 : vector<1x16x16xf32> to vector<16x16xf32>
    %21 = vector.shape_cast %17 : vector<16x16xf32> to vector<1x16x16xf32>
    tpu.vector_store %arg6[%18, %c0_14, %c0_15], %21 {strides = array<i32>} : memref<6x16x16xf32, #tpu.memory_space<vmem>>, vector<1x16x16xf32>,
    %c1_i32 = arith.constant 1 : i32
    %c16_i32_16 = arith.constant 16 : i32
    %22 = arith.muli %c1_i32, %c16_i32_16 : i32
    %23 = tpu.assume_multiple %22, 16 : i32
    %24 = arith.index_cast %23 : i32 to index
    %c0_17 = arith.constant 0 : index
    %25 = vector.load %arg7[%24, %c0_17] : memref<96x16xf32, #tpu.memory_space<vmem>>, vector<16x16xf32>
    %cst_18 = arith.constant dense<0.000000e+00> : vector<16x16xf32>
    %26 = tpu.matmul %5, %25, %cst_18 {dimension_numbers = #tpu.dot_dimension_numbers<[1], [0], [0], [1], [0, 0, 1, 1], [], []>} : vector<16x16xf32>, vector<16x16xf32>, vector<16x16xf32> -> vector<16x16xf32>
    %27 = arith.addf %26, %6 : vector<16x16xf32>
    %28 = math.floor %27 : vector<16x16xf32>
    %cst_19 = arith.constant 0.000000e+00 : f32
    %cst_20 = arith.constant 2.550000e+02 : f32
    %29 = vector.broadcast %cst_19 : f32 to vector<16x16xf32>
    %30 = arith.maximumf %29, %28 : vector<16x16xf32>
    %31 = vector.broadcast %cst_20 : f32 to vector<16x16xf32>
    %32 = arith.minimumf %31, %30 : vector<16x16xf32>
    %33 = arith.index_cast %c1_i32 : i32 to index
    %c0_21 = arith.constant 0 : index
    %c0_22 = arith.constant 0 : index
    %34 = vector.load %arg6[%33, %c0_21, %c0_22] : memref<6x16x16xf32, #tpu.memory_space<vmem>>, vector<1x16x16xf32>
    %35 = vector.shape_cast %34 : vector<1x16x16xf32> to vector<16x16xf32>
    %36 = vector.shape_cast %32 : vector<16x16xf32> to vector<1x16x16xf32>
    tpu.vector_store %arg6[%33, %c0_21, %c0_22], %36 {strides = array<i32>} : memref<6x16x16xf32, #tpu.memory_space<vmem>>, vector<1x16x16xf32>,
    %c2_i32 = arith.constant 2 : i32
    %c16_i32_23 = arith.constant 16 : i32
    %37 = arith.muli %c2_i32, %c16_i32_23 : i32
    %38 = tpu.assume_multiple %37, 16 : i32
    %39 = arith.index_cast %38 : i32 to index
    %c0_24 = arith.constant 0 : index
    %40 = vector.load %arg7[%39, %c0_24] : memref<96x16xf32, #tpu.memory_space<vmem>>, vector<16x16xf32>
    %cst_25 = arith.constant dense<0.000000e+00> : vector<16x16xf32>
    %41 = tpu.matmul %5, %40, %cst_25 {dimension_numbers = #tpu.dot_dimension_numbers<[1], [0], [0], [1], [0, 0, 1, 1], [], []>} : vector<16x16xf32>, vector<16x16xf32>, vector<16x16xf32> -> vector<16x16xf32>
    %42 = arith.addf %41, %6 : vector<16x16xf32>
    %43 = math.floor %42 : vector<16x16xf32>
    %cst_26 = arith.constant 0.000000e+00 : f32
    %cst_27 = arith.constant 2.550000e+02 : f32
    %44 = vector.broadcast %cst_26 : f32 to vector<16x16xf32>
    %45 = arith.maximumf %44, %43 : vector<16x16xf32>
    %46 = vector.broadcast %cst_27 : f32 to vector<16x16xf32>
    %47 = arith.minimumf %46, %45 : vector<16x16xf32>
    %48 = arith.index_cast %c2_i32 : i32 to index
    %c0_28 = arith.constant 0 : index
    %c0_29 = arith.constant 0 : index
    %49 = vector.load %arg6[%48, %c0_28, %c0_29] : memref<6x16x16xf32, #tpu.memory_space<vmem>>, vector<1x16x16xf32>
    %50 = vector.shape_cast %49 : vector<1x16x16xf32> to vector<16x16xf32>
    %51 = vector.shape_cast %47 : vector<16x16xf32> to vector<1x16x16xf32>
    tpu.vector_store %arg6[%48, %c0_28, %c0_29], %51 {strides = array<i32>} : memref<6x16x16xf32, #tpu.memory_space<vmem>>, vector<1x16x16xf32>,
    %c3_i32 = arith.constant 3 : i32
    %c16_i32_30 = arith.constant 16 : i32
    %52 = arith.muli %c3_i32, %c16_i32_30 : i32
    %53 = tpu.assume_multiple %52, 16 : i32
    %54 = arith.index_cast %53 : i32 to index
    %c0_31 = arith.constant 0 : index
    %55 = vector.load %arg7[%54, %c0_31] : memref<96x16xf32, #tpu.memory_space<vmem>>, vector<16x16xf32>
    %cst_32 = arith.constant dense<0.000000e+00> : vector<16x16xf32>
    %56 = tpu.matmul %5, %55, %cst_32 {dimension_numbers = #tpu.dot_dimension_numbers<[1], [0], [0], [1], [0, 0, 1, 1], [], []>} : vector<16x16xf32>, vector<16x16xf32>, vector<16x16xf32> -> vector<16x16xf32>
    %57 = arith.addf %56, %6 : vector<16x16xf32>
    %58 = math.floor %57 : vector<16x16xf32>
    %cst_33 = arith.constant 0.000000e+00 : f32
    %cst_34 = arith.constant 2.550000e+02 : f32
    %59 = vector.broadcast %cst_33 : f32 to vector<16x16xf32>
    %60 = arith.maximumf %59, %58 : vector<16x16xf32>
    %61 = vector.broadcast %cst_34 : f32 to vector<16x16xf32>
    %62 = arith.minimumf %61, %60 : vector<16x16xf32>
    %63 = arith.index_cast %c3_i32 : i32 to index
    %c0_35 = arith.constant 0 : index
    %c0_36 = arith.constant 0 : index
    %64 = vector.load %arg6[%63, %c0_35, %c0_36] : memref<6x16x16xf32, #tpu.memory_space<vmem>>, vector<1x16x16xf32>
    %65 = vector.shape_cast %64 : vector<1x16x16xf32> to vector<16x16xf32>
    %66 = vector.shape_cast %62 : vector<16x16xf32> to vector<1x16x16xf32>
    tpu.vector_store %arg6[%63, %c0_35, %c0_36], %66 {strides = array<i32>} : memref<6x16x16xf32, #tpu.memory_space<vmem>>, vector<1x16x16xf32>,
    %c4_i32 = arith.constant 4 : i32
    %c16_i32_37 = arith.constant 16 : i32
    %67 = arith.muli %c4_i32, %c16_i32_37 : i32
    %68 = tpu.assume_multiple %67, 16 : i32
    %69 = arith.index_cast %68 : i32 to index
    %c0_38 = arith.constant 0 : index
    %70 = vector.load %arg7[%69, %c0_38] : memref<96x16xf32, #tpu.memory_space<vmem>>, vector<16x16xf32>
    %cst_39 = arith.constant dense<0.000000e+00> : vector<16x16xf32>
    %71 = tpu.matmul %5, %70, %cst_39 {dimension_numbers = #tpu.dot_dimension_numbers<[1], [0], [0], [1], [0, 0, 1, 1], [], []>} : vector<16x16xf32>, vector<16x16xf32>, vector<16x16xf32> -> vector<16x16xf32>
    %72 = arith.addf %71, %6 : vector<16x16xf32>
    %73 = math.floor %72 : vector<16x16xf32>
    %cst_40 = arith.constant 0.000000e+00 : f32
    %cst_41 = arith.constant 2.550000e+02 : f32
    %74 = vector.broadcast %cst_40 : f32 to vector<16x16xf32>
    %75 = arith.maximumf %74, %73 : vector<16x16xf32>
    %76 = vector.broadcast %cst_41 : f32 to vector<16x16xf32>
    %77 = arith.minimumf %76, %75 : vector<16x16xf32>
    %78 = arith.index_cast %c4_i32 : i32 to index
    %c0_42 = arith.constant 0 : index
    %c0_43 = arith.constant 0 : index
    %79 = vector.load %arg6[%78, %c0_42, %c0_43] : memref<6x16x16xf32, #tpu.memory_space<vmem>>, vector<1x16x16xf32>
    %80 = vector.shape_cast %79 : vector<1x16x16xf32> to vector<16x16xf32>
    %81 = vector.shape_cast %77 : vector<16x16xf32> to vector<1x16x16xf32>
    tpu.vector_store %arg6[%78, %c0_42, %c0_43], %81 {strides = array<i32>} : memref<6x16x16xf32, #tpu.memory_space<vmem>>, vector<1x16x16xf32>,
    %c5_i32 = arith.constant 5 : i32
    %c16_i32_44 = arith.constant 16 : i32
    %82 = arith.muli %c5_i32, %c16_i32_44 : i32
    %83 = tpu.assume_multiple %82, 16 : i32
    %84 = arith.index_cast %83 : i32 to index
    %c0_45 = arith.constant 0 : index
    %85 = vector.load %arg7[%84, %c0_45] : memref<96x16xf32, #tpu.memory_space<vmem>>, vector<16x16xf32>
    %cst_46 = arith.constant dense<0.000000e+00> : vector<16x16xf32>
    %86 = tpu.matmul %5, %85, %cst_46 {dimension_numbers = #tpu.dot_dimension_numbers<[1], [0], [0], [1], [0, 0, 1, 1], [], []>} : vector<16x16xf32>, vector<16x16xf32>, vector<16x16xf32> -> vector<16x16xf32>
    %87 = arith.addf %86, %6 : vector<16x16xf32>
    %88 = math.floor %87 : vector<16x16xf32>
    %cst_47 = arith.constant 0.000000e+00 : f32
    %cst_48 = arith.constant 2.550000e+02 : f32
    %89 = vector.broadcast %cst_47 : f32 to vector<16x16xf32>
    %90 = arith.maximumf %89, %88 : vector<16x16xf32>
    %91 = vector.broadcast %cst_48 : f32 to vector<16x16xf32>
    %92 = arith.minimumf %91, %90 : vector<16x16xf32>
    %93 = arith.index_cast %c5_i32 : i32 to index
    %c0_49 = arith.constant 0 : index
    %c0_50 = arith.constant 0 : index
    %94 = vector.load %arg6[%93, %c0_49, %c0_50] : memref<6x16x16xf32, #tpu.memory_space<vmem>>, vector<1x16x16xf32>
    %95 = vector.shape_cast %94 : vector<1x16x16xf32> to vector<16x16xf32>
    %96 = vector.shape_cast %92 : vector<16x16xf32> to vector<1x16x16xf32>
    tpu.vector_store %arg6[%93, %c0_49, %c0_50], %96 {strides = array<i32>} : memref<6x16x16xf32, #tpu.memory_space<vmem>>, vector<1x16x16xf32>,
    %c6_i32 = arith.constant 6 : i32
    return
  }
  func.func @transform_0(%arg0: i32, %arg1: i32) -> (i32, i32, i32) {
    %c0_i32 = arith.constant 0 : i32
    %c0_i32_0 = arith.constant 0 : i32
    %c0_i32_1 = arith.constant 0 : i32
    return %arg0, %c0_i32, %c0_i32_0 : i32, i32, i32
  }
  func.func @transform_1(%arg0: i32, %arg1: i32) -> (i32, i32) {
    %c0_i32 = arith.constant 0 : i32
    %c0_i32_0 = arith.constant 0 : i32
    %c0_i32_1 = arith.constant 0 : i32
    return %c0_i32, %c0_i32_0 : i32, i32
  }
  func.func @transform_2(%arg0: i32, %arg1: i32) -> (i32, i32) {
    %c0_i32 = arith.constant 0 : i32
    %c0_i32_0 = arith.constant 0 : i32
    return %c0_i32, %arg1 : i32, i32
  }
  func.func @transform_3(%arg0: i32, %arg1: i32) -> (i32, i32) {
    %c0_i32 = arith.constant 0 : i32
    %c0_i32_0 = arith.constant 0 : i32
    return %c0_i32, %arg1 : i32, i32
  }
  func.func @transform_4(%arg0: i32, %arg1: i32) -> (i32, i32, i32) {
    %c0_i32 = arith.constant 0 : i32
    %c0_i32_0 = arith.constant 0 : i32
    return %arg0, %c0_i32, %arg1 : i32, i32, i32
  }
}

</mosaic_0001>

<llo_original>
// kernel: _pad_resize_call.1
$region0: #{_pad_resize_call.1}
  #allocation0 [shape = 'u32[]', space=smem, size = 0x4, offset = 0x4, fixed_abs, tag = 'smem constant byte address 0x4 - core index']
  #allocation1 [shape = 'u32[144,128]{1,0:T(1,128)}', space=vmem, size = 0x12000, scoped, tag = 'internal scratch']
  #allocation2 [shape = 'f32[96,16]{1,0:T(8,128)}', space=vmem, size = 0xc000, scoped, tag = 'scratch operand']
  %s0 = inlined_call_operand.hbm [shape: f32[6,16,16], index: 0, kind: input, shape index: {}]
  %s1 = inlined_call_operand.hbm [shape: f32[16,16], index: 1, kind: input, shape index: {}]
  %s2 = inlined_call_operand.hbm [shape: f32[16,16], index: 2, kind: input, shape index: {}]
  %s3 = inlined_call_operand.hbm [shape: f32[16,16], index: 3, kind: input, shape index: {}]
  %s4 = inlined_call_operand.hbm [shape: f32[6,16,16], index: 4, kind: output, shape index: {}]
  %s5 = sld [smem:[#allocation0]]
  $region42: #{_pad_resize_call.1} parent=0
    _
  %s7 = ssub.s32 1, %s5
  %s8 = scalar_select 0, %s7, %s5
  $region1: #{_pad_resize_call.1} parent=0
    #allocation3 [shape = 'u8[49152]{0}', space=vmem, size = 0xc000, scoped, tag = 'input window, operand 0, single buffered']
    #allocation4 [shape = 's32[1]{0}', space=sflag, size = 0x4, scoped, tag = 'scoped memory for _pad_resize_call.1']
    #allocation5 [shape = 's32[1]{0}', space=sflag, size = 0x4, scoped, tag = 'scoped memory for _pad_resize_call.1']
    #allocation6 [shape = 'u8[8192]{0}', space=vmem, size = 0x2000, scoped, tag = 'input window, operand 1, single buffered']
    #allocation7 [shape = 's32[1]{0}', space=sflag, size = 0x4, scoped, tag = 'scoped memory for _pad_resize_call.1']
    #allocation8 [shape = 'u8[8192]{0}', space=vmem, size = 0x2000, scoped, tag = 'input window, operand 2, single buffered']
    #allocation9 [shape = 'u8[8192]{0}', space=vmem, size = 0x2000, scoped, tag = 'input window, operand 3, single buffered']
    #allocation10 [shape = 's32[1]{0}', space=sflag, size = 0x4, scoped, tag = 'scoped memory for _pad_resize_call.1']
    #allocation11 [shape = 'u8[49152]{0}', space=vmem, size = 0xc000, scoped, tag = 'output window, operand 0, single buffered']
    %9 = vsyncpa [#allocation4], 0
    %10 = vsyncpa [#allocation7], 0
    %11 = vsyncpa [#allocation10], 0
    %12 = vsyncpa [#allocation5], 0
    // Predicated region
    $region2: #{_pad_resize_call.1} parent=1 // pred_check
      _
    $region3: #{_pad_resize_call.1} parent=1 // pred_check_branch
      %14 = sbr.rel (0) target = $region5
    $region4: #{_pad_resize_call.1} parent=1 // pred_region
      %s16 = ssub.s32 1536, 1536
      %17 = vsyncadd [#allocation4], %s16
      %s18 = sshll.u32 [#allocation3], 4
      %s19 = int_to_ptr.vmem [resolvable:$true] %s18
      %24 = dma.hbm_to_vmem [thread:$0]  %s0, 1536, %s19, [#allocation4], 128, 128, 8
    $region5: #{_pad_resize_call.1} parent=1 // pred_fallthru
      _
    // Predicated region
    $region6: #{_pad_resize_call.1} parent=1 // pred_check
      _
    $region7: #{_pad_resize_call.1} parent=1 // pred_check_branch
      %26 = sbr.rel (0) target = $region9
    $region8: #{_pad_resize_call.1} parent=1 // pred_region
      %s28 = ssub.s32 256, 256
      %29 = vsyncadd [#allocation7], %s28
      %s30 = sshll.u32 [#allocation6], 4
      %s31 = int_to_ptr.vmem [resolvable:$true] %s30
      %36 = dma.hbm_to_vmem [thread:$0]  %s1, 256, %s31, [#allocation7], 128, 128, 8
    $region9: #{_pad_resize_call.1} parent=1 // pred_fallthru
      _
    // Predicated region
    $region10: #{_pad_resize_call.1} parent=1 // pred_check
      _
    $region11: #{_pad_resize_call.1} parent=1 // pred_check_branch
      %38 = sbr.rel (0) target = $region13
    $region12: #{_pad_resize_call.1} parent=1 // pred_region
      %s40 = ssub.s32 256, 256
      %41 = vsyncadd [#allocation7], %s40
      %s42 = sshll.u32 [#allocation8], 4
      %s43 = int_to_ptr.vmem [resolvable:$true] %s42
      %48 = dma.hbm_to_vmem [thread:$0]  %s2, 256, %s43, [#allocation7], 128, 128, 8
    $region13: #{_pad_resize_call.1} parent=1 // pred_fallthru
      _
    // Predicated region
    $region14: #{_pad_resize_call.1} parent=1 // pred_check
      _
    $region15: #{_pad_resize_call.1} parent=1 // pred_check_branch
      %50 = sbr.rel (0) target = $region17
    $region16: #{_pad_resize_call.1} parent=1 // pred_region
      %s52 = ssub.s32 256, 256
      %53 = vsyncadd [#allocation10], %s52
      %s54 = sshll.u32 [#allocation9], 4
      %s55 = int_to_ptr.vmem [resolvable:$true] %s54
      %60 = dma.hbm_to_vmem [thread:$0]  %s3, 256, %s55, [#allocation10], 128, 128, 8
    $region17: #{_pad_resize_call.1} parent=1 // pred_fallthru
      _
    // Predicated region
    $region18: #{_pad_resize_call.1} parent=1 // pred_check
      _
    $region19: #{_pad_resize_call.1} parent=1 // pred_check_branch
      %62 = sbr.rel (0) target = $region21
    $region20: #{_pad_resize_call.1} parent=1 // pred_region
      %63 = dma.done [#allocation4], 1536
    $region21: #{_pad_resize_call.1} parent=1 // pred_fallthru
      _
    // Predicated region
    $region22: #{_pad_resize_call.1} parent=1 // pred_check
      _
    $region23: #{_pad_resize_call.1} parent=1 // pred_check_branch
      %65 = sbr.rel (0) target = $region25
    $region24: #{_pad_resize_call.1} parent=1 // pred_region
      %66 = dma.done [#allocation7], 256
    $region25: #{_pad_resize_call.1} parent=1 // pred_fallthru
      _
    // Predicated region
    $region26: #{_pad_resize_call.1} parent=1 // pred_check
      _
    $region27: #{_pad_resize_call.1} parent=1 // pred_check_branch
      %68 = sbr.rel (0) target = $region29
    $region28: #{_pad_resize_call.1} parent=1 // pred_region
      %69 = dma.done [#allocation7], 256
    $region29: #{_pad_resize_call.1} parent=1 // pred_fallthru
      _
    // Predicated region
    $region30: #{_pad_resize_call.1} parent=1 // pred_check
      _
    $region31: #{_pad_resize_call.1} parent=1 // pred_check_branch
      %71 = sbr.rel (0) target = $region33
    $region32: #{_pad_resize_call.1} parent=1 // pred_region
      %72 = dma.done [#allocation10], 256
    $region33: #{_pad_resize_call.1} parent=1 // pred_fallthru
      _
    %v73 = vld [vmem:[#allocation3] sm:$0xff]
    %v74 = vld [vmem:[#allocation3 + $0x8] sm:$0xff]
    %v75 = vld [vmem:[#allocation3 + $0x10] sm:$0xff]
    %v76 = vld [vmem:[#allocation3 + $0x18] sm:$0xff]
    %v77 = vld [vmem:[#allocation3 + $0x20] sm:$0xff]
    %v78 = vld [vmem:[#allocation3 + $0x28] sm:$0xff]
    %v79 = vld [vmem:[#allocation3 + $0x30] sm:$0xff]
    %v80 = vld [vmem:[#allocation3 + $0x38] sm:$0xff]
    %v81 = vld [vmem:[#allocation3 + $0x40] sm:$0xff]
    %v82 = vld [vmem:[#allocation3 + $0x48] sm:$0xff]
    %v83 = vld [vmem:[#allocation3 + $0x50] sm:$0xff]
    %v84 = vld [vmem:[#allocation3 + $0x58] sm:$0xff]
    %v85 = vld [vmem:[#allocation8] sm:$0xff]
    %v86 = vld [vmem:[#allocation8 + $0x8] sm:$0xff]
    %vm87 = vcmask 130048
    %v89 = vsel %vm87, %v73, 0
    %v92 = vsel %vm87, %v74, 0
    %v95 = vsel %vm87, %v75, 0
    %v98 = vsel %vm87, %v76, 0
    %v101 = vsel %vm87, %v77, 0
    %v104 = vsel %vm87, %v78, 0
    %v107 = vsel %vm87, %v79, 0
    %v110 = vsel %vm87, %v80, 0
    %v113 = vsel %vm87, %v81, 0
    %v116 = vsel %vm87, %v82, 0
    %v119 = vsel %vm87, %v83, 0
    %v122 = vsel %vm87, %v84, 0
    %124 = vmatprep.subr.mxu0 0.0
    %125 = vmatpush1.msra.mxu0 %v85
    %126 = vmatprep.subr.mxu0 0.0
    %127 = vmatpush1.msra.mxu0 %v86
    %128 = vmatprep.subr.mxu0 0.0
    %129 = vmatpush1.msra.mxu0 0.0
    %130 = vmatprep.subr.mxu0 0.0
    %131 = vmatpush1.msra.mxu0 0.0
    %132 = vmatprep.subr.mxu0 0.0
    %133 = vmatpush1.msra.mxu0 0.0
    %134 = vmatprep.subr.mxu0 0.0
    %135 = vmatpush1.msra.mxu0 0.0
    %136 = vmatprep.subr.mxu0 0.0
    %137 = vmatpush1.msra.mxu0 0.0
    %138 = vmatprep.subr.mxu0 0.0
    %139 = vmatpush1.msra.mxu0 0.0
    %140 = vmatprep.subr.mxu0 0.0
    %141 = vmatpush1.msra.mxu0 0.0
    %142 = vmatprep.subr.mxu0 0.0
    %143 = vmatpush1.msra.mxu0 0.0
    %144 = vmatprep.subr.mxu0 0.0
    %145 = vmatpush1.msra.mxu0 0.0
    %146 = vmatprep.subr.mxu0 0.0
    %147 = vmatpush1.msra.mxu0 0.0
    %148 = vmatprep.subr.mxu0 0.0
    %149 = vmatpush1.msra.mxu0 0.0
    %150 = vmatprep.subr.mxu0 0.0
    %151 = vmatpush1.msra.mxu0 0.0
    %152 = vmatprep.subr.mxu0 0.0
    %153 = vmatpush1.msra.mxu0 0.0
    %154 = vmatprep.subr.mxu0 0.0
    %155 = vmatpush1.msra.mxu0 0.0
    %156 = vmatprep.subr.mxu0 0.0
    %157 = vmatpush1.msra.mxu0 0.0
    %158 = vmatprep.subr.mxu0 0.0
    %159 = vmatpush1.msra.mxu0 0.0
    %160 = vmatprep.subr.mxu0 0.0
    %161 = vmatpush1.msra.mxu0 0.0
    %162 = vmatprep.subr.mxu0 0.0
    %163 = vmatpush1.msra.mxu0 0.0
    %164 = vmatprep.subr.mxu0 0.0
    %165 = vmatpush1.msra.mxu0 0.0
    %166 = vmatprep.subr.mxu0 0.0
    %167 = vmatpush1.msra.mxu0 0.0
    %168 = vmatprep.subr.mxu0 0.0
    %169 = vmatpush1.msra.mxu0 0.0
    %170 = vmatprep.subr.mxu0 0.0
    %171 = vmatpush1.msra.mxu0 0.0
    %172 = vmatprep.subr.mxu0 0.0
    %173 = vmatpush1.msra.mxu0 0.0
    %174 = vmatprep.subr.mxu0 0.0
    %175 = vmatpush1.msra.mxu0 0.0
    %176 = vmatprep.subr.mxu0 0.0
    %177 = vmatpush1.msra.mxu0 0.0
    %178 = vmatprep.subr.mxu0 0.0
    %179 = vmatpush1.msra.mxu0 0.0
    %180 = vmatprep.subr.mxu0 0.0
    %181 = vmatpush1.msra.mxu0 0.0
    %182 = vmatprep.subr.mxu0 0.0
    %183 = vmatpush1.msra.mxu0 0.0
    %184 = vmatprep.subr.mxu0 0.0
    %185 = vmatpush1.msra.mxu0 0.0
    %186 = vmatprep.subr.mxu0 0.0
    %187 = vmatpush1.msra.mxu0 0.0
    %188 = vmatprep.mubr.f32.mxu0 0.0
    %189 = vmatmul.mubr.f32.gmra.mrb[0].mxu0 %v89
    %v190 = vpop.f32.mrb[0].mxu0
    %v191 = vadd.f32 0.0, %v190
    %v192 = vpop.f32.mrb[0].mxu0
    %193 = vmatprep.mubr.f32.mxu0 0.0
    %194 = vmatmul.mubr.f32.gmra.mrb[0].mxu0 %v92
    %v195 = vpop.f32.mrb[0].mxu0
    %v196 = vadd.f32 0.0, %v195
    %v197 = vpop.f32.mrb[0].mxu0
    %198 = vmatprep.mubr.f32.mxu0 0.0
    %199 = vmatmul.mubr.f32.gmra.mrb[0].mxu0 %v95
    %v200 = vpop.f32.mrb[0].mxu0
    %v201 = vadd.f32 0.0, %v200
    %v202 = vpop.f32.mrb[0].mxu0
    %203 = vmatprep.mubr.f32.mxu0 0.0
    %204 = vmatmul.mubr.f32.gmra.mrb[0].mxu0 %v98
    %v205 = vpop.f32.mrb[0].mxu0
    %v206 = vadd.f32 0.0, %v205
    %v207 = vpop.f32.mrb[0].mxu0
    %208 = vmatprep.mubr.f32.mxu0 0.0
    %209 = vmatmul.mubr.f32.gmra.mrb[0].mxu0 %v101
    %v210 = vpop.f32.mrb[0].mxu0
    %v211 = vadd.f32 0.0, %v210
    %v212 = vpop.f32.mrb[0].mxu0
    %213 = vmatprep.mubr.f32.mxu0 0.0
    %214 = vmatmul.mubr.f32.gmra.mrb[0].mxu0 %v104
    %v215 = vpop.f32.mrb[0].mxu0
    %v216 = vadd.f32 0.0, %v215
    %v217 = vpop.f32.mrb[0].mxu0
    %218 = vmatprep.mubr.f32.mxu0 0.0
    %219 = vmatmul.mubr.f32.gmra.mrb[0].mxu0 %v107
    %v220 = vpop.f32.mrb[0].mxu0
    %v221 = vadd.f32 0.0, %v220
    %v222 = vpop.f32.mrb[0].mxu0
    %223 = vmatprep.mubr.f32.mxu0 0.0
    %224 = vmatmul.mubr.f32.gmra.mrb[0].mxu0 %v110
    %v225 = vpop.f32.mrb[0].mxu0
    %v226 = vadd.f32 0.0, %v225
    %v227 = vpop.f32.mrb[0].mxu0
    %228 = vmatprep.mubr.f32.mxu0 0.0
    %229 = vmatmul.mubr.f32.gmra.mrb[0].mxu0 %v113
    %v230 = vpop.f32.mrb[0].mxu0
    %v231 = vadd.f32 0.0, %v230
    %v232 = vpop.f32.mrb[0].mxu0
    %233 = vmatprep.mubr.f32.mxu0 0.0
    %234 = vmatmul.mubr.f32.gmra.mrb[0].mxu0 %v116
    %v235 = vpop.f32.mrb[0].mxu0
    %v236 = vadd.f32 0.0, %v235
    %v237 = vpop.f32.mrb[0].mxu0
    %238 = vmatprep.mubr.f32.mxu0 0.0
    %239 = vmatmul.mubr.f32.gmra.mrb[0].mxu0 %v119
    %v240 = vpop.f32.mrb[0].mxu0
    %v241 = vadd.f32 0.0, %v240
    %v242 = vpop.f32.mrb[0].mxu0
    %243 = vmatprep.mubr.f32.mxu0 0.0
    %244 = vmatmul.mubr.f32.gmra.mrb[0].mxu0 %v122
    %v245 = vpop.f32.mrb[0].mxu0
    %v246 = vadd.f32 0.0, %v245
    %v247 = vpop.f32.mrb[0].mxu0
    %248 = vdwg.mxu0
    %249 = vst.msk [vmem:[#allocation2] sm:$0xff] %vm87, %v191
    %250 = vst.msk [vmem:[#allocation2 + $0x8] sm:$0xff] %vm87, %v196
    %251 = vst.msk [vmem:[#allocation2 + $0x10] sm:$0xff] %vm87, %v201
    %252 = vst.msk [vmem:[#allocation2 + $0x18] sm:$0xff] %vm87, %v206
    %253 = vst.msk [vmem:[#allocation2 + $0x20] sm:$0xff] %vm87, %v211
    %254 = vst.msk [vmem:[#allocation2 + $0x28] sm:$0xff] %vm87, %v216
    %255 = vst.msk [vmem:[#allocation2 + $0x30] sm:$0xff] %vm87, %v221
    %256 = vst.msk [vmem:[#allocation2 + $0x38] sm:$0xff] %vm87, %v226
    %257 = vst.msk [vmem:[#allocation2 + $0x40] sm:$0xff] %vm87, %v231
    %258 = vst.msk [vmem:[#allocation2 + $0x48] sm:$0xff] %vm87, %v236
    %259 = vst.msk [vmem:[#allocation2 + $0x50] sm:$0xff] %vm87, %v241
    %260 = vst.msk [vmem:[#allocation2 + $0x58] sm:$0xff] %vm87, %v246
    %v261 = vld [vmem:[#allocation6] sm:$0xff]
    %v262 = vld [vmem:[#allocation6 + $0x8] sm:$0xff]
    %v263 = vld [vmem:[#allocation9] sm:$0xff]
    %v264 = vld [vmem:[#allocation9 + $0x8] sm:$0xff]
    %v265 = vld [vmem:[#allocation2] sm:$0xff]
    %v266 = vld [vmem:[#allocation2 + $0x8] sm:$0xff]
    %v268 = vsel %vm87, %v261, 0
    %v271 = vsel %vm87, %v262, 0
    %273 = vmatprep.subr.mxu0 0.0
    %274 = vmatpush1.msra.mxu0 %v265
    %275 = vmatprep.subr.mxu0 0.0
    %276 = vmatpush1.msra.mxu0 %v266
    %277 = vmatprep.subr.mxu0 0.0
    %278 = vmatpush1.msra.mxu0 0.0
    %279 = vmatprep.subr.mxu0 0.0
    %280 = vmatpush1.msra.mxu0 0.0
    %281 = vmatprep.subr.mxu0 0.0
    %282 = vmatpush1.msra.mxu0 0.0
    %283 = vmatprep.subr.mxu0 0.0
    %284 = vmatpush1.msra.mxu0 0.0
    %285 = vmatprep.subr.mxu0 0.0
    %286 = vmatpush1.msra.mxu0 0.0
    %287 = vmatprep.subr.mxu0 0.0
    %288 = vmatpush1.msra.mxu0 0.0
    %289 = vmatprep.subr.mxu0 0.0
    %290 = vmatpush1.msra.mxu0 0.0
    %291 = vmatprep.subr.mxu0 0.0
    %292 = vmatpush1.msra.mxu0 0.0
    %293 = vmatprep.subr.mxu0 0.0
    %294 = vmatpush1.msra.mxu0 0.0
    %295 = vmatprep.subr.mxu0 0.0
    %296 = vmatpush1.msra.mxu0 0.0
    %297 = vmatprep.subr.mxu0 0.0
    %298 = vmatpush1.msra.mxu0 0.0
    %299 = vmatprep.subr.mxu0 0.0
    %300 = vmatpush1.msra.mxu0 0.0
    %301 = vmatprep.subr.mxu0 0.0
    %302 = vmatpush1.msra.mxu0 0.0
    %303 = vmatprep.subr.mxu0 0.0
    %304 = vmatpush1.msra.mxu0 0.0
    %305 = vmatprep.subr.mxu0 0.0
    %306 = vmatpush1.msra.mxu0 0.0
    %307 = vmatprep.subr.mxu0 0.0
    %308 = vmatpush1.msra.mxu0 0.0
    %309 = vmatprep.subr.mxu0 0.0
    %310 = vmatpush1.msra.mxu0 0.0
    %311 = vmatprep.subr.mxu0 0.0
    %312 = vmatpush1.msra.mxu0 0.0
    %313 = vmatprep.subr.mxu0 0.0
    %314 = vmatpush1.msra.mxu0 0.0
    %315 = vmatprep.subr.mxu0 0.0
    %316 = vmatpush1.msra.mxu0 0.0
    %317 = vmatprep.subr.mxu0 0.0
    %318 = vmatpush1.msra.mxu0 0.0
    %319 = vmatprep.subr.mxu0 0.0
    %320 = vmatpush1.msra.mxu0 0.0
    %321 = vmatprep.subr.mxu0 0.0
    %322 = vmatpush1.msra.mxu0 0.0
    %323 = vmatprep.subr.mxu0 0.0
    %324 = vmatpush1.msra.mxu0 0.0
    %325 = vmatprep.subr.mxu0 0.0
    %326 = vmatpush1.msra.mxu0 0.0
    %327 = vmatprep.subr.mxu0 0.0
    %328 = vmatpush1.msra.mxu0 0.0
    %329 = vmatprep.subr.mxu0 0.0
    %330 = vmatpush1.msra.mxu0 0.0
    %331 = vmatprep.subr.mxu0 0.0
    %332 = vmatpush1.msra.mxu0 0.0
    %333 = vmatprep.subr.mxu0 0.0
    %334 = vmatpush1.msra.mxu0 0.0
    %335 = vmatprep.subr.mxu0 0.0
    %336 = vmatpush1.msra.mxu0 0.0
    %337 = vmatprep.mubr.f32.mxu0 0.0
    %338 = vmatmul.mubr.f32.gmra.mrb[0].mxu0 %v268
    %v339 = vpop.f32.mrb[0].mxu0
    %v340 = vadd.f32 %v263, %v339
    %v341 = vpop.f32.mrb[0].mxu0
    %342 = vmatprep.mubr.f32.mxu0 0.0
    %343 = vmatmul.mubr.f32.gmra.mrb[0].mxu0 %v271
    %v344 = vpop.f32.mrb[0].mxu0
    %v345 = vadd.f32 %v264, %v344
    %v346 = vpop.f32.mrb[0].mxu0
    %347 = vdwg.mxu0
    %v348 = vfloor.f32 %v340
    %v349 = vfloor.f32 %v345
    %v350 = vmax.f32 %v348, 0.0
    %v351 = vmax.f32 %v349, 0.0
    %v352 = vmin.f32 %v350, 255.0
    %v353 = vmin.f32 %v351, 255.0
    %354 = vst.msk [vmem:[#allocation11] sm:$0xff] %vm87, %v352
    %355 = vst.msk [vmem:[#allocation11 + $0x8] sm:$0xff] %vm87, %v353
    %s356 = scalar_lea.vmem [#allocation2], 16
    %v357 = vld [vmem:[%s356] sm:$0xff]
    %v358 = vld [vmem:[%s356 + $0x8] sm:$0xff]
    %359 = vmatprep.subr.mxu0 0.0
    %360 = vmatpush1.msra.mxu0 %v357
    %361 = vmatprep.subr.mxu0 0.0
    %362 = vmatpush1.msra.mxu0 %v358
    %363 = vmatprep.subr.mxu0 0.0
    %364 = vmatpush1.msra.mxu0 0.0
    %365 = vmatprep.subr.mxu0 0.0
    %366 = vmatpush1.msra.mxu0 0.0
    %367 = vmatprep.subr.mxu0 0.0
    %368 = vmatpush1.msra.mxu0 0.0
    %369 = vmatprep.subr.mxu0 0.0
    %370 = vmatpush1.msra.mxu0 0.0
    %371 = vmatprep.subr.mxu0 0.0
    %372 = vmatpush1.msra.mxu0 0.0
    %373 = vmatprep.subr.mxu0 0.0
    %374 = vmatpush1.msra.mxu0 0.0
    %375 = vmatprep.subr.mxu0 0.0
    %376 = vmatpush1.msra.mxu0 0.0
    %377 = vmatprep.subr.mxu0 0.0
    %378 = vmatpush1.msra.mxu0 0.0
    %379 = vmatprep.subr.mxu0 0.0
    %380 = vmatpush1.msra.mxu0 0.0
    %381 = vmatprep.subr.mxu0 0.0
    %382 = vmatpush1.msra.mxu0 0.0
    %383 = vmatprep.subr.mxu0 0.0
    %384 = vmatpush1.msra.mxu0 0.0
    %385 = vmatprep.subr.mxu0 0.0
    %386 = vmatpush1.msra.mxu0 0.0
    %387 = vmatprep.subr.mxu0 0.0
    %388 = vmatpush1.msra.mxu0 0.0
    %389 = vmatprep.subr.mxu0 0.0
    %390 = vmatpush1.msra.mxu0 0.0
    %391 = vmatprep.subr.mxu0 0.0
    %392 = vmatpush1.msra.mxu0 0.0
    %393 = vmatprep.subr.mxu0 0.0
    %394 = vmatpush1.msra.mxu0 0.0
    %395 = vmatprep.subr.mxu0 0.0
    %396 = vmatpush1.msra.mxu0 0.0
    %397 = vmatprep.subr.mxu0 0.0
    %398 = vmatpush1.msra.mxu0 0.0
    %399 = vmatprep.subr.mxu0 0.0
    %400 = vmatpush1.msra.mxu0 0.0
    %401 = vmatprep.subr.mxu0 0.0
    %402 = vmatpush1.msra.mxu0 0.0
    %403 = vmatprep.subr.mxu0 0.0
    %404 = vmatpush1.msra.mxu0 0.0
    %405 = vmatprep.subr.mxu0 0.0
    %406 = vmatpush1.msra.mxu0 0.0
    %407 = vmatprep.subr.mxu0 0.0
    %408 = vmatpush1.msra.mxu0 0.0
    %409 = vmatprep.subr.mxu0 0.0
    %410 = vmatpush1.msra.mxu0 0.0
    %411 = vmatprep.subr.mxu0 0.0
    %412 = vmatpush1.msra.mxu0 0.0
    %413 = vmatprep.subr.mxu0 0.0
    %414 = vmatpush1.msra.mxu0 0.0
    %415 = vmatprep.subr.mxu0 0.0
    %416 = vmatpush1.msra.mxu0 0.0
    %417 = vmatprep.subr.mxu0 0.0
    %418 = vmatpush1.msra.mxu0 0.0
    %419 = vmatprep.subr.mxu0 0.0
    %420 = vmatpush1.msra.mxu0 0.0
    %421 = vmatprep.subr.mxu0 0.0
    %422 = vmatpush1.msra.mxu0 0.0
    %423 = vmatprep.mubr.f32.mxu0 0.0
    %424 = vmatmul.mubr.f32.gmra.mrb[0].mxu0 %v268
    %v425 = vpop.f32.mrb[0].mxu0
    %v426 = vadd.f32 %v263, %v425
    %v427 = vpop.f32.mrb[0].mxu0
    %428 = vmatprep.mubr.f32.mxu0 0.0
    %429 = vmatmul.mubr.f32.gmra.mrb[0].mxu0 %v271
    %v430 = vpop.f32.mrb[0].mxu0
    %v431 = vadd.f32 %v264, %v430
    %v432 = vpop.f32.mrb[0].mxu0
    %433 = vdwg.mxu0
    %v434 = vfloor.f32 %v426
    %v435 = vfloor.f32 %v431
    %v436 = vmax.f32 %v434, 0.0
    %v437 = vmax.f32 %v435, 0.0
    %v438 = vmin.f32 %v436, 255.0
    %v439 = vmin.f32 %v437, 255.0
    %s440 = scalar_lea.vmem [#allocation11], 16
    %441 = vst.msk [vmem:[%s440] sm:$0xff] %vm87, %v438
    %442 = vst.msk [vmem:[%s440 + $0x8] sm:$0xff] %vm87, %v439
    %s443 = scalar_lea.vmem [#allocation2], 32
    %v444 = vld [vmem:[%s443] sm:$0xff]
    %v445 = vld [vmem:[%s443 + $0x8] sm:$0xff]
    %446 = vmatprep.subr.mxu0 0.0
    %447 = vmatpush1.msra.mxu0 %v444
    %448 = vmatprep.subr.mxu0 0.0
    %449 = vmatpush1.msra.mxu0 %v445
    %450 = vmatprep.subr.mxu0 0.0
    %451 = vmatpush1.msra.mxu0 0.0
    %452 = vmatprep.subr.mxu0 0.0
    %453 = vmatpush1.msra.mxu0 0.0
    %454 = vmatprep.subr.mxu0 0.0
    %455 = vmatpush1.msra.mxu0 0.0
    %456 = vmatprep.subr.mxu0 0.0
    %457 = vmatpush1.msra.mxu0 0.0
    %458 = vmatprep.subr.mxu0 0.0
    %459 = vmatpush1.msra.mxu0 0.0
    %460 = vmatprep.subr.mxu0 0.0
    %461 = vmatpush1.msra.mxu0 0.0
    %462 = vmatprep.subr.mxu0 0.0
    %463 = vmatpush1.msra.mxu0 0.0
    %464 = vmatprep.subr.mxu0 0.0
    %465 = vmatpush1.msra.mxu0 0.0
    %466 = vmatprep.subr.mxu0 0.0
    %467 = vmatpush1.msra.mxu0 0.0
    %468 = vmatprep.subr.mxu0 0.0
    %469 = vmatpush1.msra.mxu0 0.0
    %470 = vmatprep.subr.mxu0 0.0
    %471 = vmatpush1.msra.mxu0 0.0
    %472 = vmatprep.subr.mxu0 0.0
    %473 = vmatpush1.msra.mxu0 0.0
    %474 = vmatprep.subr.mxu0 0.0
    %475 = vmatpush1.msra.mxu0 0.0
    %476 = vmatprep.subr.mxu0 0.0
    %477 = vmatpush1.msra.mxu0 0.0
    %478 = vmatprep.subr.mxu0 0.0
    %479 = vmatpush1.msra.mxu0 0.0
    %480 = vmatprep.subr.mxu0 0.0
    %481 = vmatpush1.msra.mxu0 0.0
    %482 = vmatprep.subr.mxu0 0.0
    %483 = vmatpush1.msra.mxu0 0.0
    %484 = vmatprep.subr.mxu0 0.0
    %485 = vmatpush1.msra.mxu0 0.0
    %486 = vmatprep.subr.mxu0 0.0
    %487 = vmatpush1.msra.mxu0 0.0
    %488 = vmatprep.subr.mxu0 0.0
    %489 = vmatpush1.msra.mxu0 0.0
    %490 = vmatprep.subr.mxu0 0.0
    %491 = vmatpush1.msra.mxu0 0.0
    %492 = vmatprep.subr.mxu0 0.0
    %493 = vmatpush1.msra.mxu0 0.0
    %494 = vmatprep.subr.mxu0 0.0
    %495 = vmatpush1.msra.mxu0 0.0
    %496 = vmatprep.subr.mxu0 0.0
    %497 = vmatpush1.msra.mxu0 0.0
    %498 = vmatprep.subr.mxu0 0.0
    %499 = vmatpush1.msra.mxu0 0.0
    %500 = vmatprep.subr.mxu0 0.0
    %501 = vmatpush1.msra.mxu0 0.0
    %502 = vmatprep.subr.mxu0 0.0
    %503 = vmatpush1.msra.mxu0 0.0
    %504 = vmatprep.subr.mxu0 0.0
    %505 = vmatpush1.msra.mxu0 0.0
    %506 = vmatprep.subr.mxu0 0.0
    %507 = vmatpush1.msra.mxu0 0.0
    %508 = vmatprep.subr.mxu0 0.0
    %509 = vmatpush1.msra.mxu0 0.0
    %510 = vmatprep.mubr.f32.mxu0 0.0
    %511 = vmatmul.mubr.f32.gmra.mrb[0].mxu0 %v268
    %v512 = vpop.f32.mrb[0].mxu0
    %v513 = vadd.f32 %v263, %v512
    %v514 = vpop.f32.mrb[0].mxu0
    %515 = vmatprep.mubr.f32.mxu0 0.0
    %516 = vmatmul.mubr.f32.gmra.mrb[0].mxu0 %v271
    %v517 = vpop.f32.mrb[0].mxu0
    %v518 = vadd.f32 %v264, %v517
    %v519 = vpop.f32.mrb[0].mxu0
    %520 = vdwg.mxu0
    %v521 = vfloor.f32 %v513
    %v522 = vfloor.f32 %v518
    %v523 = vmax.f32 %v521, 0.0
    %v524 = vmax.f32 %v522, 0.0
    %v525 = vmin.f32 %v523, 255.0
    %v526 = vmin.f32 %v524, 255.0
    %s527 = scalar_lea.vmem [#allocation11], 32
    %528 = vst.msk [vmem:[%s527] sm:$0xff] %vm87, %v525
    %529 = vst.msk [vmem:[%s527 + $0x8] sm:$0xff] %vm87, %v526
    %s530 = scalar_lea.vmem [#allocation2], 48
    %v531 = vld [vmem:[%s530] sm:$0xff]
    %v532 = vld [vmem:[%s530 + $0x8] sm:$0xff]
    %533 = vmatprep.subr.mxu0 0.0
    %534 = vmatpush1.msra.mxu0 %v531
    %535 = vmatprep.subr.mxu0 0.0
    %536 = vmatpush1.msra.mxu0 %v532
    %537 = vmatprep.subr.mxu0 0.0
    %538 = vmatpush1.msra.mxu0 0.0
    %539 = vmatprep.subr.mxu0 0.0
    %540 = vmatpush1.msra.mxu0 0.0
    %541 = vmatprep.subr.mxu0 0.0
    %542 = vmatpush1.msra.mxu0 0.0
    %543 = vmatprep.subr.mxu0 0.0
    %544 = vmatpush1.msra.mxu0 0.0
    %545 = vmatprep.subr.mxu0 0.0
    %546 = vmatpush1.msra.mxu0 0.0
    %547 = vmatprep.subr.mxu0 0.0
    %548 = vmatpush1.msra.mxu0 0.0
    %549 = vmatprep.subr.mxu0 0.0
    %550 = vmatpush1.msra.mxu0 0.0
    %551 = vmatprep.subr.mxu0 0.0
    %552 = vmatpush1.msra.mxu0 0.0
    %553 = vmatprep.subr.mxu0 0.0
    %554 = vmatpush1.msra.mxu0 0.0
    %555 = vmatprep.subr.mxu0 0.0
    %556 = vmatpush1.msra.mxu0 0.0
    %557 = vmatprep.subr.mxu0 0.0
    %558 = vmatpush1.msra.mxu0 0.0
    %559 = vmatprep.subr.mxu0 0.0
    %560 = vmatpush1.msra.mxu0 0.0
    %561 = vmatprep.subr.mxu0 0.0
    %562 = vmatpush1.msra.mxu0 0.0
    %563 = vmatprep.subr.mxu0 0.0
    %564 = vmatpush1.msra.mxu0 0.0
    %565 = vmatprep.subr.mxu0 0.0
    %566 = vmatpush1.msra.mxu0 0.0
    %567 = vmatprep.subr.mxu0 0.0
    %568 = vmatpush1.msra.mxu0 0.0
    %569 = vmatprep.subr.mxu0 0.0
    %570 = vmatpush1.msra.mxu0 0.0
    %571 = vmatprep.subr.mxu0 0.0
    %572 = vmatpush1.msra.mxu0 0.0
    %573 = vmatprep.subr.mxu0 0.0
    %574 = vmatpush1.msra.mxu0 0.0
    %575 = vmatprep.subr.mxu0 0.0
    %576 = vmatpush1.msra.mxu0 0.0
    %577 = vmatprep.subr.mxu0 0.0
    %578 = vmatpush1.msra.mxu0 0.0
    %579 = vmatprep.subr.mxu0 0.0
    %580 = vmatpush1.msra.mxu0 0.0
    %581 = vmatprep.subr.mxu0 0.0
    %582 = vmatpush1.msra.mxu0 0.0
    %583 = vmatprep.subr.mxu0 0.0
    %584 = vmatpush1.msra.mxu0 0.0
    %585 = vmatprep.subr.mxu0 0.0
    %586 = vmatpush1.msra.mxu0 0.0
    %587 = vmatprep.subr.mxu0 0.0
    %588 = vmatpush1.msra.mxu0 0.0
    %589 = vmatprep.subr.mxu0 0.0
    %590 = vmatpush1.msra.mxu0 0.0
    %591 = vmatprep.subr.mxu0 0.0
    %592 = vmatpush1.msra.mxu0 0.0
    %593 = vmatprep.subr.mxu0 0.0
    %594 = vmatpush1.msra.mxu0 0.0
    %595 = vmatprep.subr.mxu0 0.0
    %596 = vmatpush1.msra.mxu0 0.0
    %597 = vmatprep.mubr.f32.mxu0 0.0
    %598 = vmatmul.mubr.f32.gmra.mrb[0].mxu0 %v268
    %v599 = vpop.f32.mrb[0].mxu0
    %v600 = vadd.f32 %v263, %v599
    %v601 = vpop.f32.mrb[0].mxu0
    %602 = vmatprep.mubr.f32.mxu0 0.0
    %603 = vmatmul.mubr.f32.gmra.mrb[0].mxu0 %v271
    %v604 = vpop.f32.mrb[0].mxu0
    %v605 = vadd.f32 %v264, %v604
    %v606 = vpop.f32.mrb[0].mxu0
    %607 = vdwg.mxu0
    %v608 = vfloor.f32 %v600
    %v609 = vfloor.f32 %v605
    %v610 = vmax.f32 %v608, 0.0
    %v611 = vmax.f32 %v609, 0.0
    %v612 = vmin.f32 %v610, 255.0
    %v613 = vmin.f32 %v611, 255.0
    %s614 = scalar_lea.vmem [#allocation11], 48
    %615 = vst.msk [vmem:[%s614] sm:$0xff] %vm87, %v612
    %616 = vst.msk [vmem:[%s614 + $0x8] sm:$0xff] %vm87, %v613
    %s617 = scalar_lea.vmem [#allocation2], 64
    %v618 = vld [vmem:[%s617] sm:$0xff]
    %v619 = vld [vmem:[%s617 + $0x8] sm:$0xff]
    %620 = vmatprep.subr.mxu0 0.0
    %621 = vmatpush1.msra.mxu0 %v618
    %622 = vmatprep.subr.mxu0 0.0
    %623 = vmatpush1.msra.mxu0 %v619
    %624 = vmatprep.subr.mxu0 0.0
    %625 = vmatpush1.msra.mxu0 0.0
    %626 = vmatprep.subr.mxu0 0.0
    %627 = vmatpush1.msra.mxu0 0.0
    %628 = vmatprep.subr.mxu0 0.0
    %629 = vmatpush1.msra.mxu0 0.0
    %630 = vmatprep.subr.mxu0 0.0
    %631 = vmatpush1.msra.mxu0 0.0
    %632 = vmatprep.subr.mxu0 0.0
    %633 = vmatpush1.msra.mxu0 0.0
    %634 = vmatprep.subr.mxu0 0.0
    %635 = vmatpush1.msra.mxu0 0.0
    %636 = vmatprep.subr.mxu0 0.0
    %637 = vmatpush1.msra.mxu0 0.0
    %638 = vmatprep.subr.mxu0 0.0
    %639 = vmatpush1.msra.mxu0 0.0
    %640 = vmatprep.subr.mxu0 0.0
    %641 = vmatpush1.msra.mxu0 0.0
    %642 = vmatprep.subr.mxu0 0.0
    %643 = vmatpush1.msra.mxu0 0.0
    %644 = vmatprep.subr.mxu0 0.0
    %645 = vmatpush1.msra.mxu0 0.0
    %646 = vmatprep.subr.mxu0 0.0
    %647 = vmatpush1.msra.mxu0 0.0
    %648 = vmatprep.subr.mxu0 0.0
    %649 = vmatpush1.msra.mxu0 0.0
    %650 = vmatprep.subr.mxu0 0.0
    %651 = vmatpush1.msra.mxu0 0.0
    %652 = vmatprep.subr.mxu0 0.0
    %653 = vmatpush1.msra.mxu0 0.0
    %654 = vmatprep.subr.mxu0 0.0
    %655 = vmatpush1.msra.mxu0 0.0
    %656 = vmatprep.subr.mxu0 0.0
    %657 = vmatpush1.msra.mxu0 0.0
    %658 = vmatprep.subr.mxu0 0.0
    %659 = vmatpush1.msra.mxu0 0.0
    %660 = vmatprep.subr.mxu0 0.0
    %661 = vmatpush1.msra.mxu0 0.0
    %662 = vmatprep.subr.mxu0 0.0
    %663 = vmatpush1.msra.mxu0 0.0
    %664 = vmatprep.subr.mxu0 0.0
    %665 = vmatpush1.msra.mxu0 0.0
    %666 = vmatprep.subr.mxu0 0.0
    %667 = vmatpush1.msra.mxu0 0.0
    %668 = vmatprep.subr.mxu0 0.0
    %669 = vmatpush1.msra.mxu0 0.0
    %670 = vmatprep.subr.mxu0 0.0
    %671 = vmatpush1.msra.mxu0 0.0
    %672 = vmatprep.subr.mxu0 0.0
    %673 = vmatpush1.msra.mxu0 0.0
    %674 = vmatprep.subr.mxu0 0.0
    %675 = vmatpush1.msra.mxu0 0.0
    %676 = vmatprep.subr.mxu0 0.0
    %677 = vmatpush1.msra.mxu0 0.0
    %678 = vmatprep.subr.mxu0 0.0
    %679 = vmatpush1.msra.mxu0 0.0
    %680 = vmatprep.subr.mxu0 0.0
    %681 = vmatpush1.msra.mxu0 0.0
    %682 = vmatprep.subr.mxu0 0.0
    %683 = vmatpush1.msra.mxu0 0.0
    %684 = vmatprep.mubr.f32.mxu0 0.0
    %685 = vmatmul.mubr.f32.gmra.mrb[0].mxu0 %v268
    %v686 = vpop.f32.mrb[0].mxu0
    %v687 = vadd.f32 %v263, %v686
    %v688 = vpop.f32.mrb[0].mxu0
    %689 = vmatprep.mubr.f32.mxu0 0.0
    %690 = vmatmul.mubr.f32.gmra.mrb[0].mxu0 %v271
    %v691 = vpop.f32.mrb[0].mxu0
    %v692 = vadd.f32 %v264, %v691
    %v693 = vpop.f32.mrb[0].mxu0
    %694 = vdwg.mxu0
    %v695 = vfloor.f32 %v687
    %v696 = vfloor.f32 %v692
    %v697 = vmax.f32 %v695, 0.0
    %v698 = vmax.f32 %v696, 0.0
    %v699 = vmin.f32 %v697, 255.0
    %v700 = vmin.f32 %v698, 255.0
    %s701 = scalar_lea.vmem [#allocation11], 64
    %702 = vst.msk [vmem:[%s701] sm:$0xff] %vm87, %v699
    %703 = vst.msk [vmem:[%s701 + $0x8] sm:$0xff] %vm87, %v700
    %s704 = scalar_lea.vmem [#allocation2], 80
    %v705 = vld [vmem:[%s704] sm:$0xff]
    %v706 = vld [vmem:[%s704 + $0x8] sm:$0xff]
    %707 = vmatprep.subr.mxu0 0.0
    %708 = vmatpush1.msra.mxu0 %v705
    %709 = vmatprep.subr.mxu0 0.0
    %710 = vmatpush1.msra.mxu0 %v706
    %711 = vmatprep.subr.mxu0 0.0
    %712 = vmatpush1.msra.mxu0 0.0
    %713 = vmatprep.subr.mxu0 0.0
    %714 = vmatpush1.msra.mxu0 0.0
    %715 = vmatprep.subr.mxu0 0.0
    %716 = vmatpush1.msra.mxu0 0.0
    %717 = vmatprep.subr.mxu0 0.0
    %718 = vmatpush1.msra.mxu0 0.0
    %719 = vmatprep.subr.mxu0 0.0
    %720 = vmatpush1.msra.mxu0 0.0
    %721 = vmatprep.subr.mxu0 0.0
    %722 = vmatpush1.msra.mxu0 0.0
    %723 = vmatprep.subr.mxu0 0.0
    %724 = vmatpush1.msra.mxu0 0.0
    %725 = vmatprep.subr.mxu0 0.0
    %726 = vmatpush1.msra.mxu0 0.0
    %727 = vmatprep.subr.mxu0 0.0
    %728 = vmatpush1.msra.mxu0 0.0
    %729 = vmatprep.subr.mxu0 0.0
    %730 = vmatpush1.msra.mxu0 0.0
    %731 = vmatprep.subr.mxu0 0.0
    %732 = vmatpush1.msra.mxu0 0.0
    %733 = vmatprep.subr.mxu0 0.0
    %734 = vmatpush1.msra.mxu0 0.0
    %735 = vmatprep.subr.mxu0 0.0
    %736 = vmatpush1.msra.mxu0 0.0
    %737 = vmatprep.subr.mxu0 0.0
    %738 = vmatpush1.msra.mxu0 0.0
    %739 = vmatprep.subr.mxu0 0.0
    %740 = vmatpush1.msra.mxu0 0.0
    %741 = vmatprep.subr.mxu0 0.0
    %742 = vmatpush1.msra.mxu0 0.0
    %743 = vmatprep.subr.mxu0 0.0
    %744 = vmatpush1.msra.mxu0 0.0
    %745 = vmatprep.subr.mxu0 0.0
    %746 = vmatpush1.msra.mxu0 0.0
    %747 = vmatprep.subr.mxu0 0.0
    %748 = vmatpush1.msra.mxu0 0.0
    %749 = vmatprep.subr.mxu0 0.0
    %750 = vmatpush1.msra.mxu0 0.0
    %751 = vmatprep.subr.mxu0 0.0
    %752 = vmatpush1.msra.mxu0 0.0
    %753 = vmatprep.subr.mxu0 0.0
    %754 = vmatpush1.msra.mxu0 0.0
    %755 = vmatprep.subr.mxu0 0.0
    %756 = vmatpush1.msra.mxu0 0.0
    %757 = vmatprep.subr.mxu0 0.0
    %758 = vmatpush1.msra.mxu0 0.0
    %759 = vmatprep.subr.mxu0 0.0
    %760 = vmatpush1.msra.mxu0 0.0
    %761 = vmatprep.subr.mxu0 0.0
    %762 = vmatpush1.msra.mxu0 0.0
    %763 = vmatprep.subr.mxu0 0.0
    %764 = vmatpush1.msra.mxu0 0.0
    %765 = vmatprep.subr.mxu0 0.0
    %766 = vmatpush1.msra.mxu0 0.0
    %767 = vmatprep.subr.mxu0 0.0
    %768 = vmatpush1.msra.mxu0 0.0
    %769 = vmatprep.subr.mxu0 0.0
    %770 = vmatpush1.msra.mxu0 0.0
    %771 = vmatprep.mubr.f32.mxu0 0.0
    %772 = vmatmul.mubr.f32.gmra.mrb[0].mxu0 %v268
    %v773 = vpop.f32.mrb[0].mxu0
    %v774 = vadd.f32 %v263, %v773
    %v775 = vpop.f32.mrb[0].mxu0
    %776 = vmatprep.mubr.f32.mxu0 0.0
    %777 = vmatmul.mubr.f32.gmra.mrb[0].mxu0 %v271
    %v778 = vpop.f32.mrb[0].mxu0
    %v779 = vadd.f32 %v264, %v778
    %v780 = vpop.f32.mrb[0].mxu0
    %781 = vdwg.mxu0
    %v782 = vfloor.f32 %v774
    %v783 = vfloor.f32 %v779
    %v784 = vmax.f32 %v782, 0.0
    %v785 = vmax.f32 %v783, 0.0
    %v786 = vmin.f32 %v784, 255.0
    %v787 = vmin.f32 %v785, 255.0
    %s788 = scalar_lea.vmem [#allocation11], 80
    %789 = vst.msk [vmem:[%s788] sm:$0xff] %vm87, %v786
    %790 = vst.msk [vmem:[%s788 + $0x8] sm:$0xff] %vm87, %v787
    // Predicated region
    $region34: #{_pad_resize_call.1} parent=1 // pred_check
      _
    $region35: #{_pad_resize_call.1} parent=1 // pred_check_branch
      %792 = sbr.rel (0) target = $region37
    $region36: #{_pad_resize_call.1} parent=1 // pred_region
      %s794 = ssub.s32 1536, 1536
      %795 = vsyncadd [#allocation5], %s794
      %s796 = sshll.u32 [#allocation11], 4
      %s797 = int_to_ptr.vmem [resolvable:$true] %s796
      %802 = dma.vmem_to_hbm [thread:$0]  %s797, 1536, %s4, [#allocation5], 128, 128, 8
    $region37: #{_pad_resize_call.1} parent=1 // pred_fallthru
      _
    // Predicated region
    $region38: #{_pad_resize_call.1} parent=1 // pred_check
      _
    $region39: #{_pad_resize_call.1} parent=1 // pred_check_branch
      %804 = sbr.rel (0) target = $region41
    $region40: #{_pad_resize_call.1} parent=1 // pred_region
      %805 = dma.done [#allocation5], 1536
    $region41: #{_pad_resize_call.1} parent=1 // pred_fallthru
      _
    %806 = vsyncpa [#allocation4], 1
    %807 = vsyncpa [#allocation7], 1
    %808 = vsyncpa [#allocation10], 1
    %809 = vsyncpa [#allocation5], 1

</llo_original>
